<compile_context>
chip_gen: v5e
topology: v5e:2x2
jax: 0.10.0
libtpu: 0.0.40
codegen_flags: <defaults>
</compile_context>

<pallas_src>
import jax
import jax.numpy as jnp
from jax import lax
from jax.experimental import pallas as pl
from jax.experimental.pallas import tpu as pltpu

n_embd = 384          # fixed by the module
block_size = 256      # tril buffer extent (only :T, :T is ever used)

# TODO(synk): nn.Dropout(0.2) is identity in eval mode; torch's RNG stream
# cannot be reproduced, so training-mode dropout is not applied here.


def head_kernel(x_ref, w_ref, o_ref):
    """One grid step = Bblk batch elements.

    x_ref : (Bblk, T, C)  bf16 VMEM tile
    w_ref : (C, 3H)       bf16 fused [Wk | Wq | Wv]  (shared across the grid)
    o_ref : (Bblk, T, H)  output tile (x's original dtype)
    """
    Bblk, T, C = x_ref.shape
    H = w_ref.shape[1] // 3

    # ---- fused QKV projection: single MXU matmul, N = 3H -----------------
    x2d = x_ref[...].reshape(Bblk * T, C)                              # bf16
    y = jnp.dot(x2d, w_ref[...], preferred_element_type=jnp.float32)  # (Bblk*T, 3H) f32

    k = y[:, 0 * H:1 * H].reshape(Bblk, T, H)
    q = y[:, 1 * H:2 * H].reshape(Bblk, T, H)
    v = y[:, 2 * H:3 * H].reshape(Bblk, T, H)

    # ---- scores: fold 1/sqrt(H) into q (T*H mults instead of T*T) --------
    scale = H ** -0.5
    q_s = (q * scale).astype(jnp.bfloat16)
    k_b = k.astype(jnp.bfloat16)
    # batched q @ k^T via contraction on the last dim (no materialized k.T)
    s = jnp.einsum('bqh,bkh->bqk', q_s, k_b,
                   preferred_element_type=jnp.float32)                 # (Bblk, T, T) f32

    # ---- causal mask + numerically stable softmax (f32) -------------------
    row = lax.broadcasted_iota(jnp.int32, (T, T), 0)
    col = lax.broadcasted_iota(jnp.int32, (T, T), 1)
    s = jnp.where((col <= row)[None, :, :], s, -jnp.inf)

    s = s - jnp.max(s, axis=-1, keepdims=True)
    p = jnp.exp(s)
    # normalize with EUP approx reciprocal instead of a VPU divide
    p = p * pl.reciprocal(jnp.sum(p, axis=-1, keepdims=True), approx=True)

    # ---- weighted values ---------------------------------------------------
    out = jnp.einsum('bqk,bkh->bqh',
                     p.astype(jnp.bfloat16), v.astype(jnp.bfloat16),
                     preferred_element_type=jnp.float32)                # (Bblk, T, H)
    o_ref[...] = out.astype(o_ref.dtype)


def _pick_batch_block(B, max_blk=8):
    """Largest divisor of B that is <= max_blk (amortizes grid-step overhead)."""
    for cand in range(min(B, max_blk), 0, -1):
        if B % cand == 0:
            return cand
    return 1


def head_forward(x, w_qkv, *, batch_block=None):
    """x: (B, T, C); w_qkv: (C, 3H) fused [Wk | Wq | Wv]. Returns (B, T, H)."""
    B, T, C = x.shape
    H3 = w_qkv.shape[1]
    H = H3 // 3
    Bblk = batch_block if batch_block is not None else _pick_batch_block(B)
    assert B % Bblk == 0, "batch block must divide B"

    # Cast once in the wrapper so the HBM->VMEM DMA moves bf16 (half the bytes).
    x_bf = x.astype(jnp.bfloat16)
    w_bf = w_qkv.astype(jnp.bfloat16)

    return pl.pallas_call(
        head_kernel,
        out_shape=jax.ShapeDtypeStruct((B, T, H), x.dtype),
        grid_spec=pltpu.PrefetchScalarGridSpec(
            num_scalar_prefetch=0,
            grid=(B // Bblk,),
            in_specs=[
                pl.BlockSpec((Bblk, T, C), lambda b: (b, 0, 0)),
                pl.BlockSpec((C, H3), lambda b: (0, 0)),
            ],
            out_specs=pl.BlockSpec((Bblk, T, H), lambda b: (b, 0, 0)),
        ),
        compiler_params=pltpu.CompilerParams(
            dimension_semantics=("parallel",)),
    )(x_bf, w_bf)


def head_reference(x, wk_t, wq_t, wv_t):
    """Pure-JAX f32 reference mirroring the PyTorch forward (eval mode)."""
    k = x @ wk_t
    q = x @ wq_t
    v = x @ wv_t
    wei = q @ jnp.swapaxes(k, -2, -1) * (k.shape[-1] ** (-0.5))
    T = x.shape[1]
    tril = jnp.tril(jnp.ones((T, T), dtype=x.dtype))
    wei = jnp.where(tril == 0, -jnp.inf, wei)
    wei = jax.nn.softmax(wei, axis=-1)
    return wei @ v


if __name__ == "__main__":
    B, T, H = 2, 8, 32                 # small seq / head_size; n_embd fixed at 384
    C = n_embd
    assert T <= block_size

    key = jax.random.PRNGKey(0)
    kx, kk, kq, kv = jax.random.split(key, 4)

    x = jax.random.normal(kx, (B, T, C), dtype=jnp.float32)
    # nn.Linear weights have shape (head_size, n_embd); store them transposed.
    wk_t = (jax.random.normal(kk, (H, C), dtype=jnp.float32) * (C ** -0.5)).T
    wq_t = (jax.random.normal(kq, (H, C), dtype=jnp.float32) * (C ** -0.5)).T
    wv_t = (jax.random.normal(kv, (H, C), dtype=jnp.float32) * (C ** -0.5)).T
    w_qkv = jnp.concatenate([wk_t, wq_t, wv_t], axis=1)   # fused (C, 3H)

    out = head_forward(x, w_qkv)
    out = jax.block_until_ready(out)

    ref = head_reference(x, wk_t, wq_t, wv_t)
    assert out.shape == (B, T, H)
    # bf16 MXU operands + approx reciprocal => looser tolerance than pure f32.
    max_err = jnp.max(jnp.abs(out - ref))
    assert jnp.allclose(out, ref, atol=3e-2, rtol=3e-2), (
        f"mismatch vs reference (max|err|={max_err})")

    print("KERNEL_OK")
</pallas_src>

<mosaic_0001>
module attributes {stable_mosaic.version = 11 : i64} {
  func.func @head_kernel(%arg0: i32, %arg1: memref<2x8x384xbf16, #tpu.memory_space<vmem>>, %arg2: memref<384x96xbf16, #tpu.memory_space<vmem>>, %arg3: memref<2x8x32xf32, #tpu.memory_space<vmem>>) attributes {dimension_semantics = [#tpu.dimension_semantics<parallel>], iteration_bounds = array<i64: 1>, scalar_prefetch = 0 : i64, scratch_operands = 0 : i64, tpu.core_type = #tpu.core_type<tc>, window_params = [{transform_indices = @transform_0, window_bounds = array<i64: 2, 8, 384>}, {pipeline_mode = #tpu.pipeline_mode<synchronous>, transform_indices = @transform_1, window_bounds = array<i64: 384, 96>}, {transform_indices = @transform_2, window_bounds = array<i64: 2, 8, 32>}]} {
    %c0 = arith.constant 0 : index
    %c0_0 = arith.constant 0 : index
    %c0_1 = arith.constant 0 : index
    %0 = vector.load %arg1[%c0, %c0_0, %c0_1] : memref<2x8x384xbf16, #tpu.memory_space<vmem>>, vector<2x8x384xbf16>
    %1 = vector.shape_cast %0 : vector<2x8x384xbf16> to vector<16x384xbf16>
    %c0_2 = arith.constant 0 : index
    %c0_3 = arith.constant 0 : index
    %2 = vector.load %arg2[%c0_2, %c0_3] : memref<384x96xbf16, #tpu.memory_space<vmem>>, vector<384x96xbf16>
    %cst = arith.constant dense<0.000000e+00> : vector<16x96xf32>
    %3 = tpu.matmul %1, %2, %cst {dimension_numbers = #tpu.dot_dimension_numbers<[1], [0], [0], [1], [0, 0, 1, 1], [], []>} : vector<16x384xbf16>, vector<384x96xbf16>, vector<16x96xf32> -> vector<16x96xf32>
    %4 = vector.extract_strided_slice %3 {offsets = [0, 0], sizes = [16, 32], strides = [1, 1]} : vector<16x96xf32> to vector<16x32xf32>
    %5 = vector.shape_cast %4 : vector<16x32xf32> to vector<2x8x32xf32>
    %6 = vector.extract_strided_slice %3 {offsets = [0, 32], sizes = [16, 32], strides = [1, 1]} : vector<16x96xf32> to vector<16x32xf32>
    %7 = vector.shape_cast %6 : vector<16x32xf32> to vector<2x8x32xf32>
    %8 = vector.extract_strided_slice %3 {offsets = [0, 64], sizes = [16, 32], strides = [1, 1]} : vector<16x96xf32> to vector<16x32xf32>
    %9 = vector.shape_cast %8 : vector<16x32xf32> to vector<2x8x32xf32>
    %cst_4 = arith.constant 0.176776692 : f32
    %10 = vector.broadcast %cst_4 : f32 to vector<2x8x32xf32>
    %11 = arith.mulf %7, %10 : vector<2x8x32xf32>
    %12 = arith.truncf %11 : vector<2x8x32xf32> to vector<2x8x32xbf16>
    %13 = arith.truncf %5 : vector<2x8x32xf32> to vector<2x8x32xbf16>
    "tpu.trace_start"() <{level = 10 : i32, message = "bqh,bkh->bqk"}> : () -> ()
    %cst_5 = arith.constant dense<0.000000e+00> : vector<2x8x8xf32>
    %14 = tpu.matmul %12, %13, %cst_5 {dimension_numbers = #tpu.dot_dimension_numbers<[2], [2], [1], [1], [0, 0, 0, 1, 1, 1], [0], [0]>} : vector<2x8x32xbf16>, vector<2x8x32xbf16>, vector<2x8x8xf32> -> vector<2x8x8xf32>
    "tpu.trace_stop"() : () -> ()
    %15 = tpu.iota {dimensions = array<i32: 0>} : vector<8x8xi32>
    %16 = tpu.iota {dimensions = array<i32: 1>} : vector<8x8xi32>
    %17 = arith.cmpi sle, %16, %15 : vector<8x8xi32>
    %18 = vector.shape_cast %17 : vector<8x8xi1> to vector<1x8x8xi1>
    %cst_6 = arith.constant 0xFF800000 : f32
    %19 = vector.shape_cast %18 : vector<1x8x8xi1> to vector<1x8x8xi1>
    %20 = vector.broadcast %19 : vector<1x8x8xi1> to vector<2x8x8xi1>
    %21 = vector.broadcast %cst_6 : f32 to vector<2x8x8xf32>
    %22 = arith.select %20, %14, %21 : vector<2x8x8xi1>, vector<2x8x8xf32>
    %cst_7 = arith.constant dense<0xFF800000> : vector<2x8xf32>
    %23 = vector.multi_reduction <maximumf>, %22, %cst_7 [2] : vector<2x8x8xf32> to vector<2x8xf32>
    %24 = vector.shape_cast %23 : vector<2x8xf32> to vector<2x8x1xf32>
    %25 = vector.broadcast %24 : vector<2x8x1xf32> to vector<2x8x8xf32>
    %26 = arith.subf %22, %25 : vector<2x8x8xf32>
    %27 = math.exp %26 : vector<2x8x8xf32>
    %cst_8 = arith.constant dense<0.000000e+00> : vector<2x8xf32>
    %28 = vector.multi_reduction <add>, %27, %cst_8 [2] : vector<2x8x8xf32> to vector<2x8xf32>
    %29 = vector.shape_cast %28 : vector<2x8xf32> to vector<2x8x1xf32>
    %30 = tpu.reciprocal %29 {approx = true} : vector<2x8x1xf32> -> vector<2x8x1xf32>
    %31 = vector.broadcast %30 : vector<2x8x1xf32> to vector<2x8x8xf32>
    %32 = arith.mulf %27, %31 : vector<2x8x8xf32>
    %33 = arith.truncf %32 : vector<2x8x8xf32> to vector<2x8x8xbf16>
    %34 = arith.truncf %9 : vector<2x8x32xf32> to vector<2x8x32xbf16>
    "tpu.trace_start"() <{level = 10 : i32, message = "bqk,bkh->bqh"}> : () -> ()
    %cst_9 = arith.constant dense<0.000000e+00> : vector<2x8x32xf32>
    %35 = tpu.matmul %33, %34, %cst_9 {dimension_numbers = #tpu.dot_dimension_numbers<[2], [1], [1], [2], [0, 0, 0, 1, 1, 2], [0], [0]>} : vector<2x8x8xbf16>, vector<2x8x32xbf16>, vector<2x8x32xf32> -> vector<2x8x32xf32>
    "tpu.trace_stop"() : () -> ()
    %c0_10 = arith.constant 0 : index
    %c0_11 = arith.constant 0 : index
    %c0_12 = arith.constant 0 : index
    %36 = vector.load %arg3[%c0_10, %c0_11, %c0_12] : memref<2x8x32xf32, #tpu.memory_space<vmem>>, vector<2x8x32xf32>
    tpu.vector_store %arg3[%c0_10, %c0_11, %c0_12], %35 {strides = array<i32>} : memref<2x8x32xf32, #tpu.memory_space<vmem>>, vector<2x8x32xf32>,
    return
  }
  func.func @transform_0(%arg0: i32) -> (i32, i32, i32) {
    %c0_i32 = arith.constant 0 : i32
    %c0_i32_0 = arith.constant 0 : i32
    %c0_i32_1 = arith.constant 0 : i32
    return %arg0, %c0_i32, %c0_i32_0 : i32, i32, i32
  }
  func.func @transform_1(%arg0: i32) -> (i32, i32) {
    %c0_i32 = arith.constant 0 : i32
    %c0_i32_0 = arith.constant 0 : i32
    %c0_i32_1 = arith.constant 0 : i32
    return %c0_i32, %c0_i32_0 : i32, i32
  }
  func.func @transform_2(%arg0: i32) -> (i32, i32, i32) {
    %c0_i32 = arith.constant 0 : i32
    %c0_i32_0 = arith.constant 0 : i32
    %c0_i32_1 = arith.constant 0 : i32
    return %arg0, %c0_i32, %c0_i32_0 : i32, i32, i32
  }
}

</mosaic_0001>

<llo_original>
// kernel: tpu_custom_call.1
$region0: #{tpu_custom_call.1}
  #allocation0 [shape = 'u32[]', space=smem, size = 0x4, offset = 0x4, fixed_abs, tag = 'smem constant byte address 0x4 - core index']
  #allocation1 [shape = 'u32[72,128]{1,0:T(1,128)}', space=vmem, size = 0x9000, scoped, tag = 'internal scratch']
  %s0 = inlined_call_operand.vmem [shape: bf16[2,8,384], index: 0, kind: input, shape index: {}]
  %s1 = inlined_call_operand.vmem [shape: bf16[384,96], index: 1, kind: input, shape index: {}]
  %s2 = inlined_call_operand.hbm [shape: f32[2,8,32], index: 2, kind: output, shape index: {}]
  %s3 = sld [smem:[#allocation0]]
  $region18: #{tpu_custom_call.1} parent=0
    _
  %s5 = ssub.s32 1, %s3
  %s6 = scalar_select 0, %s5, %s3
  $region1: #{tpu_custom_call.1} parent=0
    #allocation2 [shape = 'u8[8192]{0}', space=vmem, size = 0x2000, scoped, tag = 'output window, operand 0, single buffered']
    #allocation3 [shape = 's32[1]{0}', space=sflag, size = 0x4, scoped, tag = 'scoped memory for tpu_custom_call.1']
    %7 = vsyncpa [#allocation3], 0
    // Predicated region
    $region2: #{tpu_custom_call.1} parent=1 // pred_check
      _
    $region3: #{tpu_custom_call.1} parent=1 // pred_check_branch
      %9 = sbr.rel (0) target = $region5
    $region4: #{tpu_custom_call.1} parent=1 // pred_region
      _
    $region5: #{tpu_custom_call.1} parent=1 // pred_fallthru
      _
    // Predicated region
    $region6: #{tpu_custom_call.1} parent=1 // pred_check
      _
    $region7: #{tpu_custom_call.1} parent=1 // pred_check_branch
      %11 = sbr.rel (0) target = $region9
    $region8: #{tpu_custom_call.1} parent=1 // pred_region
      _
    $region9: #{tpu_custom_call.1} parent=1 // pred_fallthru
      _
    %v13 = vld [vmem:[%s0] sm:$0xff]
    %v14 = vld [vmem:[%s0 + $0x8] sm:$0xf]
    %v15 = vld [vmem:[%s0 + $0xc] sm:$0xff]
    %v16 = vld [vmem:[%s0 + $0x14] sm:$0xf]
    %v17 = vld [vmem:[%s1] sm:$0xf]
    %v18 = vld [vmem:[%s1 + $0x4] sm:$0xf]
    %v19 = vld [vmem:[%s1 + $0x8] sm:$0xf]
    %v20 = vld [vmem:[%s1 + $0xc] sm:$0xf]
    %v21 = vld [vmem:[%s1 + $0x10] sm:$0xf]
    %v22 = vld [vmem:[%s1 + $0x14] sm:$0xf]
    %v23 = vld [vmem:[%s1 + $0x18] sm:$0xf]
    %v24 = vld [vmem:[%s1 + $0x1c] sm:$0xf]
    %v25 = vld [vmem:[%s1 + $0x20] sm:$0xf]
    %v26 = vld [vmem:[%s1 + $0x24] sm:$0xf]
    %v27 = vld [vmem:[%s1 + $0x28] sm:$0xf]
    %v28 = vld [vmem:[%s1 + $0x2c] sm:$0xf]
    %v29 = vld [vmem:[%s1 + $0x30] sm:$0xf]
    %v30 = vld [vmem:[%s1 + $0x34] sm:$0xf]
    %v31 = vld [vmem:[%s1 + $0x38] sm:$0xf]
    %v32 = vld [vmem:[%s1 + $0x3c] sm:$0xf]
    %v33 = vld [vmem:[%s1 + $0x40] sm:$0xf]
    %v34 = vld [vmem:[%s1 + $0x44] sm:$0xf]
    %v35 = vld [vmem:[%s1 + $0x48] sm:$0xf]
    %v36 = vld [vmem:[%s1 + $0x4c] sm:$0xf]
    %v37 = vld [vmem:[%s1 + $0x50] sm:$0xf]
    %v38 = vld [vmem:[%s1 + $0x54] sm:$0xf]
    %v39 = vld [vmem:[%s1 + $0x58] sm:$0xf]
    %v40 = vld [vmem:[%s1 + $0x5c] sm:$0xf]
    %v41 = vld [vmem:[%s1 + $0x60] sm:$0xf]
    %v42 = vld [vmem:[%s1 + $0x64] sm:$0xf]
    %v43 = vld [vmem:[%s1 + $0x68] sm:$0xf]
    %v44 = vld [vmem:[%s1 + $0x6c] sm:$0xf]
    %v45 = vld [vmem:[%s1 + $0x70] sm:$0xf]
    %v46 = vld [vmem:[%s1 + $0x74] sm:$0xf]
    %v47 = vld [vmem:[%s1 + $0x78] sm:$0xf]
    %v48 = vld [vmem:[%s1 + $0x7c] sm:$0xf]
    %v49 = vld [vmem:[%s1 + $0x80] sm:$0xf]
    %v50 = vld [vmem:[%s1 + $0x84] sm:$0xf]
    %v51 = vld [vmem:[%s1 + $0x88] sm:$0xf]
    %v52 = vld [vmem:[%s1 + $0x8c] sm:$0xf]
    %v53 = vld [vmem:[%s1 + $0x90] sm:$0xf]
    %v54 = vld [vmem:[%s1 + $0x94] sm:$0xf]
    %v55 = vld [vmem:[%s1 + $0x98] sm:$0xf]
    %v56 = vld [vmem:[%s1 + $0x9c] sm:$0xf]
    %v57 = vld [vmem:[%s1 + $0xa0] sm:$0xf]
    %v58 = vld [vmem:[%s1 + $0xa4] sm:$0xf]
    %v59 = vld [vmem:[%s1 + $0xa8] sm:$0xf]
    %v60 = vld [vmem:[%s1 + $0xac] sm:$0xf]
    %v61 = vld [vmem:[%s1 + $0xb0] sm:$0xf]
    %v62 = vld [vmem:[%s1 + $0xb4] sm:$0xf]
    %v63 = vld [vmem:[%s1 + $0xb8] sm:$0xf]
    %v64 = vld [vmem:[%s1 + $0xbc] sm:$0xf]
    %v69 = vunpack.c.l.b16 %v13
    %v70 = vunpack.c.h.b16 %v13
    %v71 = vunpack.c.l.b16 %v14
    %v72 = vunpack.c.l.b16 %v15
    %v73 = vunpack.c.h.b16 %v15
    %v74 = vunpack.c.l.b16 %v16
    %v75 = vpack.c.b16 %v72, %v69
    %v76 = vpack.c.b16 %v73, %v70
    %v77 = vpack.c.b16 %v74, %v71
    %v129 = vunpack.c.l.b16 %v17
    %v130 = vunpack.c.l.b16 %v18
    %v131 = vunpack.c.l.b16 %v19
    %v132 = vunpack.c.l.b16 %v20
    %v133 = vunpack.c.l.b16 %v21
    %v134 = vunpack.c.l.b16 %v22
    %v135 = vunpack.c.l.b16 %v23
    %v136 = vunpack.c.l.b16 %v24
    %v137 = vunpack.c.l.b16 %v25
    %v138 = vunpack.c.l.b16 %v26
    %v139 = vunpack.c.l.b16 %v27
    %v140 = vunpack.c.l.b16 %v28
    %v141 = vunpack.c.l.b16 %v29
    %v142 = vunpack.c.l.b16 %v30
    %v143 = vunpack.c.l.b16 %v31
    %v144 = vunpack.c.l.b16 %v32
    %v145 = vunpack.c.l.b16 %v33
    %v146 = vunpack.c.l.b16 %v34
    %v147 = vunpack.c.l.b16 %v35
    %v148 = vunpack.c.l.b16 %v36
    %v149 = vunpack.c.l.b16 %v37
    %v150 = vunpack.c.l.b16 %v38
    %v151 = vunpack.c.l.b16 %v39
    %v152 = vunpack.c.l.b16 %v40
    %v153 = vunpack.c.l.b16 %v41
    %v154 = vunpack.c.l.b16 %v42
    %v155 = vunpack.c.l.b16 %v43
    %v156 = vunpack.c.l.b16 %v44
    %v157 = vunpack.c.l.b16 %v45
    %v158 = vunpack.c.l.b16 %v46
    %v159 = vunpack.c.l.b16 %v47
    %v160 = vunpack.c.l.b16 %v48
    %v161 = vunpack.c.l.b16 %v49
    %v162 = vunpack.c.l.b16 %v50
    %v163 = vunpack.c.l.b16 %v51
    %v164 = vunpack.c.l.b16 %v52
    %v165 = vunpack.c.l.b16 %v53
    %v166 = vunpack.c.l.b16 %v54
    %v167 = vunpack.c.l.b16 %v55
    %v168 = vunpack.c.l.b16 %v56
    %v169 = vunpack.c.l.b16 %v57
    %v170 = vunpack.c.l.b16 %v58
    %v171 = vunpack.c.l.b16 %v59
    %v172 = vunpack.c.l.b16 %v60
    %v173 = vunpack.c.l.b16 %v61
    %v174 = vunpack.c.l.b16 %v62
    %v175 = vunpack.c.l.b16 %v63
    %v176 = vunpack.c.l.b16 %v64
    %v177 = vpack.c.b16 %v130, %v129
    %v178 = vpack.c.b16 %v132, %v131
    %v179 = vpack.c.b16 %v134, %v133
    %v180 = vpack.c.b16 %v136, %v135
    %v181 = vpack.c.b16 %v138, %v137
    %v182 = vpack.c.b16 %v140, %v139
    %v183 = vpack.c.b16 %v142, %v141
    %v184 = vpack.c.b16 %v144, %v143
    %v185 = vpack.c.b16 %v146, %v145
    %v186 = vpack.c.b16 %v148, %v147
    %v187 = vpack.c.b16 %v150, %v149
    %v188 = vpack.c.b16 %v152, %v151
    %v189 = vpack.c.b16 %v154, %v153
    %v190 = vpack.c.b16 %v156, %v155
    %v191 = vpack.c.b16 %v158, %v157
    %v192 = vpack.c.b16 %v160, %v159
    %v193 = vpack.c.b16 %v162, %v161
    %v194 = vpack.c.b16 %v164, %v163
    %v195 = vpack.c.b16 %v166, %v165
    %v196 = vpack.c.b16 %v168, %v167
    %v197 = vpack.c.b16 %v170, %v169
    %v198 = vpack.c.b16 %v172, %v171
    %v199 = vpack.c.b16 %v174, %v173
    %v200 = vpack.c.b16 %v176, %v175
    %225 = vmatpush.bf16.msra.mxu0 %v184
    %226 = vmatpush.bf16.msra.mxu0 %v183
    %227 = vmatpush.bf16.msra.mxu0 %v182
    %228 = vmatpush.bf16.msra.mxu0 %v181
    %229 = vmatpush.bf16.msra.mxu0 %v180
    %230 = vmatpush.bf16.msra.mxu0 %v179
    %231 = vmatpush.bf16.msra.mxu0 %v178
    %232 = vmatpush.bf16.msra.mxu0 %v177
    %233 = vmatmul.bf16.gmra.mxu0 %v75
    %v234 = vpop.f32.mrf.mxu0
    %v235 = vadd.f32 0.0, %v234
    %v236 = vpop.f32.mrf.mxu0
    %v237 = vadd.f32 0.0, %v236
    %238 = vdwg.mxu0
    %239 = vmatpush.bf16.msra.mxu0 %v192
    %240 = vmatpush.bf16.msra.mxu0 %v191
    %241 = vmatpush.bf16.msra.mxu0 %v190
    %242 = vmatpush.bf16.msra.mxu0 %v189
    %243 = vmatpush.bf16.msra.mxu0 %v188
    %244 = vmatpush.bf16.msra.mxu0 %v187
    %245 = vmatpush.bf16.msra.mxu0 %v186
    %246 = vmatpush.bf16.msra.mxu0 %v185
    %247 = vmatmul.bf16.gmra.mxu0 %v76
    %v248 = vpop.f32.mrf.mxu0
    %v249 = vadd.f32 %v235, %v248
    %v250 = vpop.f32.mrf.mxu0
    %v251 = vadd.f32 %v237, %v250
    %252 = vdwg.mxu0
    %253 = vmatpush.bf16.msra.mxu0 %v200
    %254 = vmatpush.bf16.msra.mxu0 %v199
    %255 = vmatpush.bf16.msra.mxu0 %v198
    %256 = vmatpush.bf16.msra.mxu0 %v197
    %257 = vmatpush.bf16.msra.mxu0 %v196
    %258 = vmatpush.bf16.msra.mxu0 %v195
    %259 = vmatpush.bf16.msra.mxu0 %v194
    %260 = vmatpush.bf16.msra.mxu0 %v193
    %261 = vmatmul.bf16.gmra.mxu0 %v77
    %v262 = vpop.f32.mrf.mxu0
    %v263 = vadd.f32 %v249, %v262
    %v264 = vpop.f32.mrf.mxu0
    %v265 = vadd.f32 %v251, %v264
    %266 = vdwg.mxu0
    %v267 = vmul.f32 %v263, 0.17677669
    %v268 = vmul.f32 %v265, 0.17677669
    %v269 = vpack.c.bf16 %v267, %v267
    %v270 = vpack.c.bf16 %v268, %v268
    %v271 = vpack.c.bf16 %v263, %v263
    %v272 = vpack.c.bf16 %v265, %v265
    %v274 = vunpack.c.l.b16 %v269
    %v275 = vpack.c.b16 %v274, %v274
    %276 = vrot.lane.b32.xlu0 %v275, 96
    %v277 = vpop.permute.xlu0 %276
    %vm278 = vcmask 261120
    %v280 = vsel %vm278, %v277, 0
    %v283 = vsel %vm278, %v271, 0
    %285 = vmatpush.bf16.xpose.msra.mxu0 0
    %286 = vmatpush.bf16.xpose.msra.mxu0 0
    %287 = vmatpush.bf16.xpose.msra.mxu0 0
    %288 = vmatpush.bf16.xpose.msra.mxu0 0
    %289 = vmatpush.bf16.xpose.msra.mxu0 0
    %290 = vmatpush.bf16.xpose.msra.mxu0 0
    %291 = vmatpush.bf16.xpose.msra.mxu0 0
    %292 = vmatpush.bf16.xpose.msra.mxu0 %v283
    %293 = vmatmul.bf16.gmra.mxu0 %v280
    %v294 = vpop.f32.mrf.mxu0
    %v295 = vadd.f32 0.0, %v294
    %v296 = vpop.f32.mrf.mxu0
    %297 = vdwg.mxu0
    %v299 = vunpack.c.l.b16 %v270
    %v300 = vpack.c.b16 %v299, %v299
    %301 = vrot.lane.b32.xlu0 %v300, 96
    %v302 = vpop.permute.xlu0 %301
    %v304 = vsel %vm278, %v302, 0
    %v307 = vsel %vm278, %v272, 0
    %309 = vmatpush.bf16.xpose.msra.mxu0 0
    %310 = vmatpush.bf16.xpose.msra.mxu0 0
    %311 = vmatpush.bf16.xpose.msra.mxu0 0
    %312 = vmatpush.bf16.xpose.msra.mxu0 0
    %313 = vmatpush.bf16.xpose.msra.mxu0 0
    %314 = vmatpush.bf16.xpose.msra.mxu0 0
    %315 = vmatpush.bf16.xpose.msra.mxu0 0
    %316 = vmatpush.bf16.xpose.msra.mxu0 %v307
    %317 = vmatmul.bf16.gmra.mxu0 %v304
    %v318 = vpop.f32.mrf.mxu0
    %v319 = vadd.f32 0.0, %v318
    %v320 = vpop.f32.mrf.mxu0
    %321 = vdwg.mxu0
    %v322 = vlaneseq
    %v323 = vshrl.u32 %v322, 7
    %v324 = vlaneseq
    %v325 = vand.u32 %v324, 127
    %vm326 = vcmp.le.s32.totalorder %v325, %v323
    %v327 = vsel %vm326, 1, 0
    %vm328 = vcmp.eq.s32.totalorder %v327, 1
    %v329 = vsel %vm328, %v295, -inf
    %v330 = vsel %vm328, %v319, -inf
    %vm331 = vcmask 64512
    %v332 = vsel %vm331, %v329, -inf
    %333 = vmax.xlane.f32.xlu0 %v332
    %v334 = vpop.xlane.xlu0 %333
    %v335 = vsel %vm331, %v330, -inf
    %336 = vmax.xlane.f32.xlu0 %v335
    %v337 = vpop.xlane.xlu0 %336
    %v338 = vsub.f32 %v329, %v334
    %v339 = vsub.f32 %v330, %v337
    %v340 = vmul.f32 %v338, 1.442695
    %v341 = vpow.pop %v340
    %v342 = vmul.f32 %v339, 1.442695
    %v343 = vpow.pop %v342
    %v344 = vsel %vm331, %v341, 0.0
    %345 = vadd.xlane.f32.xlu0 %v344
    %v346 = vpop.xlane.xlu0 %345
    %v347 = vsel %vm331, %v343, 0.0
    %348 = vadd.xlane.f32.xlu0 %v347
    %v349 = vpop.xlane.xlu0 %348
    %v350 = vrcp.pop %v346
    %v351 = vrcp.pop %v349
    %v352 = vmul.f32 %v341, %v350
    %v353 = vmul.f32 %v343, %v351
    %v354 = vpack.c.bf16 %v352, %v352
    %v355 = vpack.c.bf16 %v353, %v353
    %v357 = vunpack.c.l.b16 %v271
    %v358 = vpack.c.b16 %v357, %v357
    %359 = vrot.lane.b32.xlu0 %v358, 64
    %v360 = vpop.permute.xlu0 %359
    %v362 = vsel %vm331, %v354, 0
    %vm364 = vcmask 1043456
    %v366 = vsel %vm364, %v360, 0
    %368 = vmatpush.bf16.msra.mxu0 0
    %369 = vmatpush.bf16.msra.mxu0 0
    %370 = vmatpush.bf16.msra.mxu0 0
    %371 = vmatpush.bf16.msra.mxu0 0
    %372 = vmatpush.bf16.msra.mxu0 0
    %373 = vmatpush.bf16.msra.mxu0 0
    %374 = vmatpush.bf16.msra.mxu0 0
    %375 = vmatpush.bf16.msra.mxu0 %v366
    %376 = vmatmul.bf16.gmra.mxu0 %v362
    %v377 = vpop.f32.mrf.mxu0
    %v378 = vadd.f32 0.0, %v377
    %v379 = vpop.f32.mrf.mxu0
    %380 = vdwg.mxu0
    %v382 = vunpack.c.l.b16 %v272
    %v383 = vpack.c.b16 %v382, %v382
    %384 = vrot.lane.b32.xlu0 %v383, 64
    %v385 = vpop.permute.xlu0 %384
    %v387 = vsel %vm331, %v355, 0
    %v390 = vsel %vm364, %v385, 0
    %392 = vmatpush.bf16.msra.mxu0 0
    %393 = vmatpush.bf16.msra.mxu0 0
    %394 = vmatpush.bf16.msra.mxu0 0
    %395 = vmatpush.bf16.msra.mxu0 0
    %396 = vmatpush.bf16.msra.mxu0 0
    %397 = vmatpush.bf16.msra.mxu0 0
    %398 = vmatpush.bf16.msra.mxu0 0
    %399 = vmatpush.bf16.msra.mxu0 %v390
    %400 = vmatmul.bf16.gmra.mxu0 %v387
    %v401 = vpop.f32.mrf.mxu0
    %v402 = vadd.f32 0.0, %v401
    %v403 = vpop.f32.mrf.mxu0
    %404 = vdwg.mxu0
    %405 = vst.msk [vmem:[#allocation2] sm:$0xff] %vm278, %v378
    %406 = vst.msk [vmem:[#allocation2 + $0x8] sm:$0xff] %vm278, %v402
    // Predicated region
    $region10: #{tpu_custom_call.1} parent=1 // pred_check
      _
    $region11: #{tpu_custom_call.1} parent=1 // pred_check_branch
      %408 = sbr.rel (0) target = $region13
    $region12: #{tpu_custom_call.1} parent=1 // pred_region
      %410 = vsyncadd [#allocation3], 0
      %s411 = sshll.u32 [#allocation2], 4
      %s412 = int_to_ptr.vmem [resolvable:$true] %s411
      %s413 = sshll.u32 %s2, 4
      %s414 = int_to_ptr.hbm [resolvable:$true] %s413
      %419 = dma.vmem_to_hbm [thread:$0]  %s412, 256, %s414, [#allocation3], 128, 128, 8
    $region13: #{tpu_custom_call.1} parent=1 // pred_fallthru
      _
    // Predicated region
    $region14: #{tpu_custom_call.1} parent=1 // pred_check
      _
    $region15: #{tpu_custom_call.1} parent=1 // pred_check_branch
      %421 = sbr.rel (0) target = $region17
    $region16: #{tpu_custom_call.1} parent=1 // pred_region
      %423 = dma.done [#allocation3], 256
    $region17: #{tpu_custom_call.1} parent=1 // pred_fallthru
      _
    %424 = vsyncpa [#allocation3], 1

</llo_original>
